<compile_context>
chip_gen: v7x
topology: tpu7x:2x2x1
jax: 0.10.0
libtpu: 0.0.40
codegen_flags: <defaults>
</compile_context>

<pallas_src>
import jax
import jax.numpy as jnp
from jax.experimental import pallas as pl
from jax.experimental.pallas import tpu as pltpu


def _round_up(x, m):
    return (x + m - 1) // m * m


def _pass1_kernel(adj_ref, d_row_ref, xw_ref, wcat_ref, z_ref, acc_ref):
    """acc[i] += (A+I)[i,k] @ XW[k];  finalize: z[i] = (d*relu(d*acc[i])) @ [W_mu|W_std]."""
    k = pl.program_id(1)

    @pl.when(k == 0)
    def _():
        acc_ref[...] = jnp.zeros_like(acc_ref)

    a = adj_ref[...].astype(xw_ref.dtype)          # int8 0/1 -> bf16 (single convert)
    acc_ref[...] += jnp.dot(a, xw_ref[...], preferred_element_type=jnp.float32)

    @pl.when(k == pl.num_programs(1) - 1)
    def _():
        d = d_row_ref[...]                                   # (tm, 1) f32
        hidden = jnp.maximum(acc_ref[...] * d, 0.0)          # relu(A_hat @ X @ W_h)
        hidden = (hidden * d).astype(wcat_ref.dtype)         # pre-scale rows for pass 2
        z = jnp.dot(hidden, wcat_ref[...], preferred_element_type=jnp.float32)
        z_ref[...] = z.astype(z_ref.dtype)


def _pass2_kernel(adj_ref, d_row_ref, z_ref, out_ref, acc_ref):
    """acc[i] += (A+I)[i,k] @ z[k];  finalize: [mu|logvar][i] = d * acc[i]."""
    k = pl.program_id(1)

    @pl.when(k == 0)
    def _():
        acc_ref[...] = jnp.zeros_like(acc_ref)

    a = adj_ref[...].astype(z_ref.dtype)
    acc_ref[...] += jnp.dot(a, z_ref[...], preferred_element_type=jnp.float32)

    @pl.when(k == pl.num_programs(1) - 1)
    def _():
        out_ref[...] = (acc_ref[...] * d_row_ref[...]).astype(out_ref.dtype)


def _choose_tiles(n, tile_m, tile_k):
    """Pick (n_pad, tm, tk): tiles stay large (no gcd collapse to 128)."""
    tile_m = _round_up(tile_m, 128)
    tile_k = _round_up(tile_k, 128)
    np128 = _round_up(n, 128)
    if np128 <= tile_m:                      # small graph: a single (few) block(s)
        n_pad = np128
        tm = tk = n_pad
    else:
        n_pad = _round_up(n, tile_m)         # pad to the row tile, not just 128
        tm = tile_m
        tk = tile_k if n_pad % tile_k == 0 else tile_m
    # v7x megacore: prefer >= 2 row blocks on the "parallel" axis when possible.
    if n_pad // tm < 2 and tm % 256 == 0:
        tm //= 2
    return n_pad, tm, tk


def _vmem_limit_bytes():
    """~96 MiB on v5e/v6e (128 MiB physical VMEM), ~48 MiB on v7x (64 MiB)."""
    try:
        cap = pltpu.get_tpu_info().vmem_capacity_bytes
    except Exception:
        cap = 64 * 1024 * 1024
    return int(min(cap * 3 // 4, 96 * 1024 * 1024))


def vgae_encoder(x, adj, w_hidden, w_mu, w_std, *,
                 tile_m=512, tile_k=1024, compute_dtype=jnp.bfloat16):
    """Fused VGAE encoder forward. x:[N,F], adj:[N,N] dense 0/1 (no self loops)."""
    n, _ = x.shape
    hid = w_hidden.shape[1]
    lat = w_mu.shape[1]

    n_pad, tm, tk = _choose_tiles(n, tile_m, tile_k)
    hid_pad = _round_up(hid, 128)
    out_pad = _round_up(2 * lat, 128)        # fused [mu | logvar], lane-dense output

    # Symmetric GCN normalization vector (self loop counted in the degree).
    deg = jnp.sum(adj.astype(jnp.float32), axis=1) + 1.0
    d_inv_sqrt = jax.lax.rsqrt(deg)
    d_all = jnp.ones((n_pad,), jnp.float32).at[:n].set(d_inv_sqrt)
    d_row = d_all.reshape(n_pad, 1)

    # (A + I) stored as int8 0/1: exact, half the HBM bytes of bf16, self-loops added
    # host-side. Padded rows/cols get a diagonal 1 too, but their X/z rows are zero so
    # rows < n are unaffected. Assumes adj carries no pre-existing self loops.
    adj_pi = jnp.zeros((n_pad, n_pad), jnp.int8).at[:n, :n].set(adj.astype(jnp.int8))
    diag = jnp.arange(n_pad)
    adj_pi = adj_pi.at[diag, diag].set(1)

    # Pass-1 reassociation: A_hat @ (X @ W_h). The tiny (N,F)x(F,H) matmul runs in the
    # wrapper (XLA); the kernel streams the (N, hid_pad) result in compute_dtype.
    xw = jnp.dot(d_inv_sqrt[:, None] * x.astype(jnp.float32),
                 w_hidden.astype(jnp.float32))
    xw_p = jnp.zeros((n_pad, hid_pad), compute_dtype).at[:n, :hid].set(
        xw.astype(compute_dtype))

    wcat = jnp.concatenate([w_mu, w_std], axis=1)
    wcat_p = jnp.zeros((hid_pad, out_pad), compute_dtype).at[:hid, :2 * lat].set(
        wcat.astype(compute_dtype))

    grid = (n_pad // tm, n_pad // tk)
    cparams = pltpu.CompilerParams(
        dimension_semantics=("parallel", "arbitrary"),
        vmem_limit_bytes=_vmem_limit_bytes(),
    )

    adj_spec = pl.BlockSpec((tm, tk), lambda i, k: (i, k))
    drow_spec = pl.BlockSpec((tm, 1), lambda i, k: (i, 0))

    # ---- pass 1: z = (D^-1/2 relu(A_hat @ X @ W_h)) @ [W_mu | W_std] ----
    z = pl.pallas_call(
        _pass1_kernel,
        grid=grid,
        in_specs=[
            adj_spec, drow_spec,
            pl.BlockSpec((tk, hid_pad), lambda i, k: (k, 0)),
            pl.BlockSpec((hid_pad, out_pad), lambda i, k: (0, 0)),
        ],
        out_specs=pl.BlockSpec((tm, out_pad), lambda i, k: (i, 0)),
        out_shape=jax.ShapeDtypeStruct((n_pad, out_pad), compute_dtype),
        scratch_shapes=[pltpu.VMEM((tm, hid_pad), jnp.float32)],
        compiler_params=cparams,
    )(adj_pi, d_row, xw_p, wcat_p)

    # ---- pass 2: [mu | logvar] = D^-1/2 ((A + I) @ z) ----
    out = pl.pallas_call(
        _pass2_kernel,
        grid=grid,
        in_specs=[
            adj_spec, drow_spec,
            pl.BlockSpec((tk, out_pad), lambda i, k: (k, 0)),
        ],
        out_specs=pl.BlockSpec((tm, out_pad), lambda i, k: (i, 0)),
        out_shape=jax.ShapeDtypeStruct((n_pad, out_pad), jnp.float32),
        scratch_shapes=[pltpu.VMEM((tm, out_pad), jnp.float32)],
        compiler_params=cparams,
    )(adj_pi, d_row, z)

    mu = out[:n, :lat]
    logvar = out[:n, lat:2 * lat]
    return mu, logvar


def _glorot(key, shape):
    fan_in, fan_out = shape
    limit = jnp.sqrt(6.0 / (fan_in + fan_out))
    return jax.random.uniform(key, shape, jnp.float32, -limit, limit)


def _reference(x, adj, w_h, w_mu, w_std, compute_dtype=jnp.bfloat16):
    """Pure-JAX reference mirroring the kernel's association and cast points."""
    n = x.shape[0]
    lat = w_mu.shape[1]
    deg = jnp.sum(adj, axis=1) + 1.0
    d = jax.lax.rsqrt(deg)
    a_pi = (adj + jnp.eye(n, dtype=adj.dtype)).astype(compute_dtype)   # 0/1: exact
    xw = jnp.dot(d[:, None] * x, w_h).astype(compute_dtype)
    acc = jnp.dot(a_pi, xw, preferred_element_type=jnp.float32)
    hidden = jnp.maximum(acc * d[:, None], 0.0) * d[:, None]
    wcat = jnp.concatenate([w_mu, w_std], axis=1).astype(compute_dtype)
    z = jnp.dot(hidden.astype(compute_dtype), wcat,
                preferred_element_type=jnp.float32).astype(compute_dtype)
    out = jnp.dot(a_pi, z, preferred_element_type=jnp.float32) * d[:, None]
    return out[:, :lat], out[:, lat:]


if __name__ == "__main__":
    N, F, HIDDEN, LATENT = 16, 8, 32, 16

    key = jax.random.PRNGKey(0)
    kx, kadj, kh, kmu, kstd = jax.random.split(key, 5)

    # Node features
    x = jax.random.normal(kx, (N, F), dtype=jnp.float32)

    # Symmetric 0/1 adjacency (no self loops; those are added in the wrapper)
    a_rand = jax.random.bernoulli(kadj, p=0.3, shape=(N, N)).astype(jnp.float32)
    adj = jnp.triu(a_rand, k=1)
    adj = adj + adj.T

    # Deterministic Glorot-initialized GCN weights (no bias, standard VGAE GCNConv)
    w_hidden = _glorot(kh, (F, HIDDEN))
    w_mu = _glorot(kmu, (HIDDEN, LATENT))
    w_std = _glorot(kstd, (HIDDEN, LATENT))

    encoder = jax.jit(vgae_encoder)
    mu, logvar = encoder(x, adj, w_hidden, w_mu, w_std)
    jax.block_until_ready((mu, logvar))

    assert mu.shape == (N, LATENT) and logvar.shape == (N, LATENT)

    mu_ref, lv_ref = _reference(x, adj, w_hidden, w_mu, w_std)
    assert jnp.allclose(mu, mu_ref, atol=1e-2, rtol=1e-2), "mu mismatch"
    assert jnp.allclose(logvar, lv_ref, atol=1e-2, rtol=1e-2), "logvar mismatch"

    # TODO(synk): edge_attr / use_edge_attr path is a no-op in the reference forward
    # (edge_attr=None); dense 0/1 adjacency is used in place of edge_index.
    print("KERNEL_OK")
</pallas_src>

<mosaic_0001>
module attributes {stable_mosaic.version = 11 : i64} {
  func.func @_pass2_kernel(%arg0: i32, %arg1: i32, %arg2: memref<128x128xi8, #tpu.memory_space<vmem>>, %arg3: memref<128x1xf32, #tpu.memory_space<vmem>>, %arg4: memref<128x128xbf16, #tpu.memory_space<vmem>>, %arg5: memref<128x128xf32, #tpu.memory_space<vmem>>, %arg6: memref<128x128xf32, #tpu.memory_space<vmem>>) attributes {dimension_semantics = [#tpu.dimension_semantics<parallel>, #tpu.dimension_semantics<arbitrary>], iteration_bounds = array<i64: 1, 1>, scalar_prefetch = 0 : i64, scratch_operands = 1 : i64, tpu.core_type = #tpu.core_type<tc>, window_params = [{transform_indices = @transform_0, window_bounds = array<i64: 128, 128>}, {transform_indices = @transform_1, window_bounds = array<i64: 128, 1>}, {transform_indices = @transform_2, window_bounds = array<i64: 128, 128>}, {transform_indices = @transform_3, window_bounds = array<i64: 128, 128>}]} {
    %c0_i32 = arith.constant 0 : i32
    %0 = arith.cmpi eq, %arg1, %c0_i32 : i32
    %1 = arith.extui %0 : i1 to i32
    %c0_i32_0 = arith.constant 0 : i32
    %2 = arith.cmpi ne, %1, %c0_i32_0 : i32
    scf.if %2 {
      %cst_10 = arith.constant 0.000000e+00 : f32
      %13 = vector.broadcast %cst_10 : f32 to vector<128x128xf32>
      %c0_11 = arith.constant 0 : index
      %c0_12 = arith.constant 0 : index
      %14 = vector.load %arg6[%c0_11, %c0_12] : memref<128x128xf32, #tpu.memory_space<vmem>>, vector<128x128xf32>
      tpu.vector_store %arg6[%c0_11, %c0_12], %13 {strides = array<i32>} : memref<128x128xf32, #tpu.memory_space<vmem>>, vector<128x128xf32>,
    } else {
    }
    %c0 = arith.constant 0 : index
    %c0_1 = arith.constant 0 : index
    %3 = vector.load %arg2[%c0, %c0_1] : memref<128x128xi8, #tpu.memory_space<vmem>>, vector<128x128xi8>
    %4 = arith.sitofp %3 : vector<128x128xi8> to vector<128x128xbf16>
    %c0_2 = arith.constant 0 : index
    %c0_3 = arith.constant 0 : index
    %5 = vector.load %arg6[%c0_2, %c0_3] : memref<128x128xf32, #tpu.memory_space<vmem>>, vector<128x128xf32>
    %c0_4 = arith.constant 0 : index
    %c0_5 = arith.constant 0 : index
    %6 = vector.load %arg4[%c0_4, %c0_5] : memref<128x128xbf16, #tpu.memory_space<vmem>>, vector<128x128xbf16>
    %cst = arith.constant dense<0.000000e+00> : vector<128x128xf32>
    %7 = tpu.matmul %4, %6, %cst {dimension_numbers = #tpu.dot_dimension_numbers<[1], [0], [0], [1], [0, 0, 1, 1], [], []>} : vector<128x128xbf16>, vector<128x128xbf16>, vector<128x128xf32> -> vector<128x128xf32>
    %8 = arith.addf %5, %7 : vector<128x128xf32>
    %c0_6 = arith.constant 0 : index
    %c0_7 = arith.constant 0 : index
    %9 = vector.load %arg6[%c0_6, %c0_7] : memref<128x128xf32, #tpu.memory_space<vmem>>, vector<128x128xf32>
    tpu.vector_store %arg6[%c0_6, %c0_7], %8 {strides = array<i32>} : memref<128x128xf32, #tpu.memory_space<vmem>>, vector<128x128xf32>,
    %c0_i32_8 = arith.constant 0 : i32
    %10 = arith.cmpi eq, %arg1, %c0_i32_8 : i32
    %11 = arith.extui %10 : i1 to i32
    %c0_i32_9 = arith.constant 0 : i32
    %12 = arith.cmpi ne, %11, %c0_i32_9 : i32
    scf.if %12 {
      %c0_10 = arith.constant 0 : index
      %c0_11 = arith.constant 0 : index
      %13 = vector.load %arg6[%c0_10, %c0_11] : memref<128x128xf32, #tpu.memory_space<vmem>>, vector<128x128xf32>
      %c0_12 = arith.constant 0 : index
      %c0_13 = arith.constant 0 : index
      %14 = vector.load %arg3[%c0_12, %c0_13] : memref<128x1xf32, #tpu.memory_space<vmem>>, vector<128x1xf32>
      %15 = vector.broadcast %14 : vector<128x1xf32> to vector<128x128xf32>
      %16 = arith.mulf %13, %15 : vector<128x128xf32>
      %c0_14 = arith.constant 0 : index
      %c0_15 = arith.constant 0 : index
      %17 = vector.load %arg5[%c0_14, %c0_15] : memref<128x128xf32, #tpu.memory_space<vmem>>, vector<128x128xf32>
      tpu.vector_store %arg5[%c0_14, %c0_15], %16 {strides = array<i32>} : memref<128x128xf32, #tpu.memory_space<vmem>>, vector<128x128xf32>,
    } else {
    }
    return
  }
  func.func @transform_0(%arg0: i32, %arg1: i32) -> (i32, i32) {
    %c0_i32 = arith.constant 0 : i32
    return %arg0, %arg1 : i32, i32
  }
  func.func @transform_1(%arg0: i32, %arg1: i32) -> (i32, i32) {
    %c0_i32 = arith.constant 0 : i32
    %c0_i32_0 = arith.constant 0 : i32
    return %arg0, %c0_i32 : i32, i32
  }
  func.func @transform_2(%arg0: i32, %arg1: i32) -> (i32, i32) {
    %c0_i32 = arith.constant 0 : i32
    %c0_i32_0 = arith.constant 0 : i32
    return %arg1, %c0_i32 : i32, i32
  }
  func.func @transform_3(%arg0: i32, %arg1: i32) -> (i32, i32) {
    %c0_i32 = arith.constant 0 : i32
    %c0_i32_0 = arith.constant 0 : i32
    return %arg0, %c0_i32 : i32, i32
  }
}

module attributes {stable_mosaic.version = 11 : i64} {
  func.func @_pass1_kernel(%arg0: i32, %arg1: i32, %arg2: memref<128x128xi8, #tpu.memory_space<vmem>>, %arg3: memref<128x1xf32, #tpu.memory_space<vmem>>, %arg4: memref<128x128xbf16, #tpu.memory_space<vmem>>, %arg5: memref<128x128xbf16, #tpu.memory_space<vmem>>, %arg6: memref<128x128xbf16, #tpu.memory_space<vmem>>, %arg7: memref<128x128xf32, #tpu.memory_space<vmem>>) attributes {dimension_semantics = [#tpu.dimension_semantics<parallel>, #tpu.dimension_semantics<arbitrary>], iteration_bounds = array<i64: 1, 1>, scalar_prefetch = 0 : i64, scratch_operands = 1 : i64, tpu.core_type = #tpu.core_type<tc>, window_params = [{transform_indices = @transform_0, window_bounds = array<i64: 128, 128>}, {transform_indices = @transform_1, window_bounds = array<i64: 128, 1>}, {transform_indices = @transform_2, window_bounds = array<i64: 128, 128>}, {pipeline_mode = #tpu.pipeline_mode<synchronous>, transform_indices = @transform_3, window_bounds = array<i64: 128, 128>}, {transform_indices = @transform_4, window_bounds = array<i64: 128, 128>}]} {
    %c0_i32 = arith.constant 0 : i32
    %0 = arith.cmpi eq, %arg1, %c0_i32 : i32
    %1 = arith.extui %0 : i1 to i32
    %c0_i32_0 = arith.constant 0 : i32
    %2 = arith.cmpi ne, %1, %c0_i32_0 : i32
    scf.if %2 {
      %cst_10 = arith.constant 0.000000e+00 : f32
      %13 = vector.broadcast %cst_10 : f32 to vector<128x128xf32>
      %c0_11 = arith.constant 0 : index
      %c0_12 = arith.constant 0 : index
      %14 = vector.load %arg7[%c0_11, %c0_12] : memref<128x128xf32, #tpu.memory_space<vmem>>, vector<128x128xf32>
      tpu.vector_store %arg7[%c0_11, %c0_12], %13 {strides = array<i32>} : memref<128x128xf32, #tpu.memory_space<vmem>>, vector<128x128xf32>,
    } else {
    }
    %c0 = arith.constant 0 : index
    %c0_1 = arith.constant 0 : index
    %3 = vector.load %arg2[%c0, %c0_1] : memref<128x128xi8, #tpu.memory_space<vmem>>, vector<128x128xi8>
    %4 = arith.sitofp %3 : vector<128x128xi8> to vector<128x128xbf16>
    %c0_2 = arith.constant 0 : index
    %c0_3 = arith.constant 0 : index
    %5 = vector.load %arg7[%c0_2, %c0_3] : memref<128x128xf32, #tpu.memory_space<vmem>>, vector<128x128xf32>
    %c0_4 = arith.constant 0 : index
    %c0_5 = arith.constant 0 : index
    %6 = vector.load %arg4[%c0_4, %c0_5] : memref<128x128xbf16, #tpu.memory_space<vmem>>, vector<128x128xbf16>
    %cst = arith.constant dense<0.000000e+00> : vector<128x128xf32>
    %7 = tpu.matmul %4, %6, %cst {dimension_numbers = #tpu.dot_dimension_numbers<[1], [0], [0], [1], [0, 0, 1, 1], [], []>} : vector<128x128xbf16>, vector<128x128xbf16>, vector<128x128xf32> -> vector<128x128xf32>
    %8 = arith.addf %5, %7 : vector<128x128xf32>
    %c0_6 = arith.constant 0 : index
    %c0_7 = arith.constant 0 : index
    %9 = vector.load %arg7[%c0_6, %c0_7] : memref<128x128xf32, #tpu.memory_space<vmem>>, vector<128x128xf32>
    tpu.vector_store %arg7[%c0_6, %c0_7], %8 {strides = array<i32>} : memref<128x128xf32, #tpu.memory_space<vmem>>, vector<128x128xf32>,
    %c0_i32_8 = arith.constant 0 : i32
    %10 = arith.cmpi eq, %arg1, %c0_i32_8 : i32
    %11 = arith.extui %10 : i1 to i32
    %c0_i32_9 = arith.constant 0 : i32
    %12 = arith.cmpi ne, %11, %c0_i32_9 : i32
    scf.if %12 {
      %c0_10 = arith.constant 0 : index
      %c0_11 = arith.constant 0 : index
      %13 = vector.load %arg3[%c0_10, %c0_11] : memref<128x1xf32, #tpu.memory_space<vmem>>, vector<128x1xf32>
      %c0_12 = arith.constant 0 : index
      %c0_13 = arith.constant 0 : index
      %14 = vector.load %arg7[%c0_12, %c0_13] : memref<128x128xf32, #tpu.memory_space<vmem>>, vector<128x128xf32>
      %15 = vector.broadcast %13 : vector<128x1xf32> to vector<128x128xf32>
      %16 = arith.mulf %14, %15 : vector<128x128xf32>
      %cst_14 = arith.constant 0.000000e+00 : f32
      %17 = vector.broadcast %cst_14 : f32 to vector<128x128xf32>
      %18 = arith.maximumf %16, %17 : vector<128x128xf32>
      %19 = vector.broadcast %13 : vector<128x1xf32> to vector<128x128xf32>
      %20 = arith.mulf %18, %19 : vector<128x128xf32>
      %21 = arith.truncf %20 : vector<128x128xf32> to vector<128x128xbf16>
      %c0_15 = arith.constant 0 : index
      %c0_16 = arith.constant 0 : index
      %22 = vector.load %arg5[%c0_15, %c0_16] : memref<128x128xbf16, #tpu.memory_space<vmem>>, vector<128x128xbf16>
      %cst_17 = arith.constant dense<0.000000e+00> : vector<128x128xf32>
      %23 = tpu.matmul %21, %22, %cst_17 {dimension_numbers = #tpu.dot_dimension_numbers<[1], [0], [0], [1], [0, 0, 1, 1], [], []>} : vector<128x128xbf16>, vector<128x128xbf16>, vector<128x128xf32> -> vector<128x128xf32>
      %24 = arith.truncf %23 : vector<128x128xf32> to vector<128x128xbf16>
      %c0_18 = arith.constant 0 : index
      %c0_19 = arith.constant 0 : index
      %25 = vector.load %arg6[%c0_18, %c0_19] : memref<128x128xbf16, #tpu.memory_space<vmem>>, vector<128x128xbf16>
      tpu.vector_store %arg6[%c0_18, %c0_19], %24 {strides = array<i32>} : memref<128x128xbf16, #tpu.memory_space<vmem>>, vector<128x128xbf16>,
    } else {
    }
    return
  }
  func.func @transform_0(%arg0: i32, %arg1: i32) -> (i32, i32) {
    %c0_i32 = arith.constant 0 : i32
    return %arg0, %arg1 : i32, i32
  }
  func.func @transform_1(%arg0: i32, %arg1: i32) -> (i32, i32) {
    %c0_i32 = arith.constant 0 : i32
    %c0_i32_0 = arith.constant 0 : i32
    return %arg0, %c0_i32 : i32, i32
  }
  func.func @transform_2(%arg0: i32, %arg1: i32) -> (i32, i32) {
    %c0_i32 = arith.constant 0 : i32
    %c0_i32_0 = arith.constant 0 : i32
    return %arg1, %c0_i32 : i32, i32
  }
  func.func @transform_3(%arg0: i32, %arg1: i32) -> (i32, i32) {
    %c0_i32 = arith.constant 0 : i32
    %c0_i32_0 = arith.constant 0 : i32
    %c0_i32_1 = arith.constant 0 : i32
    return %c0_i32, %c0_i32_0 : i32, i32
  }
  func.func @transform_4(%arg0: i32, %arg1: i32) -> (i32, i32) {
    %c0_i32 = arith.constant 0 : i32
    %c0_i32_0 = arith.constant 0 : i32
    return %arg0, %c0_i32 : i32, i32
  }
}

</mosaic_0001>

<llo_original>
// kernel: vgae_encoder.3
$region0: #{vgae_encoder.3}
  #allocation0 [shape = 'u32[]', space=smem, size = 0x4, offset = 0x4, fixed_abs, tag = 'smem constant byte address 0x4 - core index']
  #allocation1 [shape = 'u32[144,128]{1,0:T(1,128)}', space=vmem, size = 0x12000, scoped, tag = 'internal scratch']
  #allocation2 [shape = 'f32[128,128]{1,0:T(8,128)}', space=vmem, size = 0x10000, scoped, tag = 'scratch operand']
  %s0 = inlined_call_operand.vmem [shape: s8[128,128], index: 0, kind: input, shape index: {}]
  %s1 = inlined_call_operand.vmem [shape: f32[128,1], index: 1, kind: input, shape index: {}]
  %s2 = inlined_call_operand.vmem [shape: bf16[128,128], index: 2, kind: input, shape index: {}]
  %s3 = inlined_call_operand.vmem [shape: f32[128,128], index: 3, kind: output, shape index: {}]
  %s4 = sld [smem:[#allocation0]]
  $region30: #{vgae_encoder.3} parent=0
    _
  %s6 = ssub.s32 1, %s4
  %s7 = scalar_select 0, %s6, %s4
  // Predicated region
  $region2: #{vgae_encoder.3} parent=0 // pred_check
    _
  $region3: #{vgae_encoder.3} parent=0 // pred_check_branch
    %9 = sbr.rel (0) target = $region5
  $region4: #{vgae_encoder.3} parent=0 // pred_region
    _
  $region5: #{vgae_encoder.3} parent=0 // pred_fallthru
    _
  // Predicated region
  $region6: #{vgae_encoder.3} parent=0 // pred_check
    _
  $region7: #{vgae_encoder.3} parent=0 // pred_check_branch
    %11 = sbr.rel (0) target = $region9
  $region8: #{vgae_encoder.3} parent=0 // pred_region
    _
  $region9: #{vgae_encoder.3} parent=0 // pred_fallthru
    _
  // Predicated region
  $region10: #{vgae_encoder.3} parent=0 // pred_check
    _
  $region11: #{vgae_encoder.3} parent=0 // pred_check_branch
    %13 = sbr.rel (0) target = $region13
  $region12: #{vgae_encoder.3} parent=0 // pred_region
    _
  $region13: #{vgae_encoder.3} parent=0 // pred_fallthru
    _
  %p15 = scmp.eq.s32.totalorder 0, 0
  // Predicated region
  $region14: #{vgae_encoder.3} parent=0 // pred_check
    %p16 = pneg %p15
  $region15: #{vgae_encoder.3} parent=0 // pred_check_branch
    %18 = sbr.rel (%p16) target = $region17
  $region16: #{vgae_encoder.3} parent=0 // pred_region
    %19 = vst [vmem:[#allocation2] sm:$0xff] 0.0
    %20 = vst [vmem:[#allocation2 + $0x8] sm:$0xff] 0.0
    %21 = vst [vmem:[#allocation2 + $0x10] sm:$0xff] 0.0
    %22 = vst [vmem:[#allocation2 + $0x18] sm:$0xff] 0.0
    %23 = vst [vmem:[#allocation2 + $0x20] sm:$0xff] 0.0
    %24 = vst [vmem:[#allocation2 + $0x28] sm:$0xff] 0.0
    %25 = vst [vmem:[#allocation2 + $0x30] sm:$0xff] 0.0
    %26 = vst [vmem:[#allocation2 + $0x38] sm:$0xff] 0.0
    %27 = vst [vmem:[#allocation2 + $0x40] sm:$0xff] 0.0
    %28 = vst [vmem:[#allocation2 + $0x48] sm:$0xff] 0.0
    %29 = vst [vmem:[#allocation2 + $0x50] sm:$0xff] 0.0
    %30 = vst [vmem:[#allocation2 + $0x58] sm:$0xff] 0.0
    %31 = vst [vmem:[#allocation2 + $0x60] sm:$0xff] 0.0
    %32 = vst [vmem:[#allocation2 + $0x68] sm:$0xff] 0.0
    %33 = vst [vmem:[#allocation2 + $0x70] sm:$0xff] 0.0
    %34 = vst [vmem:[#allocation2 + $0x78] sm:$0xff] 0.0
  $region17: #{vgae_encoder.3} parent=0 // pred_fallthru
    _
  %v35 = vld [vmem:[%s0] sm:$0x3]
  %v36 = vld [vmem:[%s0 + $0x2] sm:$0x3]
  %v37 = vld [vmem:[%s0 + $0x4] sm:$0x3]
  %v38 = vld [vmem:[%s0 + $0x6] sm:$0x3]
  %v39 = vld [vmem:[%s0 + $0x8] sm:$0x3]
  %v40 = vld [vmem:[%s0 + $0xa] sm:$0x3]
  %v41 = vld [vmem:[%s0 + $0xc] sm:$0x3]
  %v42 = vld [vmem:[%s0 + $0xe] sm:$0x3]
  %v43 = vld [vmem:[%s0 + $0x10] sm:$0x3]
  %v44 = vld [vmem:[%s0 + $0x12] sm:$0x3]
  %v45 = vld [vmem:[%s0 + $0x14] sm:$0x3]
  %v46 = vld [vmem:[%s0 + $0x16] sm:$0x3]
  %v47 = vld [vmem:[%s0 + $0x18] sm:$0x3]
  %v48 = vld [vmem:[%s0 + $0x1a] sm:$0x3]
  %v49 = vld [vmem:[%s0 + $0x1c] sm:$0x3]
  %v50 = vld [vmem:[%s0 + $0x1e] sm:$0x3]
  %v51 = vunpack.c.l.s8.bf16 %v35
  %v52 = vunpack.c.l.s8.bf16 %v36
  %v53 = vunpack.c.l.s8.bf16 %v37
  %v54 = vunpack.c.l.s8.bf16 %v38
  %v55 = vunpack.c.l.s8.bf16 %v39
  %v56 = vunpack.c.l.s8.bf16 %v40
  %v57 = vunpack.c.l.s8.bf16 %v41
  %v58 = vunpack.c.l.s8.bf16 %v42
  %v59 = vunpack.c.l.s8.bf16 %v43
  %v60 = vunpack.c.l.s8.bf16 %v44
  %v61 = vunpack.c.l.s8.bf16 %v45
  %v62 = vunpack.c.l.s8.bf16 %v46
  %v63 = vunpack.c.l.s8.bf16 %v47
  %v64 = vunpack.c.l.s8.bf16 %v48
  %v65 = vunpack.c.l.s8.bf16 %v49
  %v66 = vunpack.c.l.s8.bf16 %v50
  %v67 = vld [vmem:[#allocation2] sm:$0xff]
  %v68 = vld [vmem:[#allocation2 + $0x8] sm:$0xff]
  %v69 = vld [vmem:[#allocation2 + $0x10] sm:$0xff]
  %v70 = vld [vmem:[#allocation2 + $0x18] sm:$0xff]
  %v71 = vld [vmem:[#allocation2 + $0x20] sm:$0xff]
  %v72 = vld [vmem:[#allocation2 + $0x28] sm:$0xff]
  %v73 = vld [vmem:[#allocation2 + $0x30] sm:$0xff]
  %v74 = vld [vmem:[#allocation2 + $0x38] sm:$0xff]
  %v75 = vld [vmem:[#allocation2 + $0x40] sm:$0xff]
  %v76 = vld [vmem:[#allocation2 + $0x48] sm:$0xff]
  %v77 = vld [vmem:[#allocation2 + $0x50] sm:$0xff]
  %v78 = vld [vmem:[#allocation2 + $0x58] sm:$0xff]
  %v79 = vld [vmem:[#allocation2 + $0x60] sm:$0xff]
  %v80 = vld [vmem:[#allocation2 + $0x68] sm:$0xff]
  %v81 = vld [vmem:[#allocation2 + $0x70] sm:$0xff]
  %v82 = vld [vmem:[#allocation2 + $0x78] sm:$0xff]
  %v83 = vld [vmem:[%s2] sm:$0xf]
  %v84 = vld [vmem:[%s2 + $0x4] sm:$0xf]
  %v85 = vld [vmem:[%s2 + $0x8] sm:$0xf]
  %v86 = vld [vmem:[%s2 + $0xc] sm:$0xf]
  %v87 = vld [vmem:[%s2 + $0x10] sm:$0xf]
  %v88 = vld [vmem:[%s2 + $0x14] sm:$0xf]
  %v89 = vld [vmem:[%s2 + $0x18] sm:$0xf]
  %v90 = vld [vmem:[%s2 + $0x1c] sm:$0xf]
  %v91 = vld [vmem:[%s2 + $0x20] sm:$0xf]
  %v92 = vld [vmem:[%s2 + $0x24] sm:$0xf]
  %v93 = vld [vmem:[%s2 + $0x28] sm:$0xf]
  %v94 = vld [vmem:[%s2 + $0x2c] sm:$0xf]
  %v95 = vld [vmem:[%s2 + $0x30] sm:$0xf]
  %v96 = vld [vmem:[%s2 + $0x34] sm:$0xf]
  %v97 = vld [vmem:[%s2 + $0x38] sm:$0xf]
  %v98 = vld [vmem:[%s2 + $0x3c] sm:$0xf]
  %v115 = vunpack.c.l.b16 %v51
  %v116 = vunpack.c.l.b16 %v52
  %v117 = vunpack.c.l.b16 %v53
  %v118 = vunpack.c.l.b16 %v54
  %v119 = vunpack.c.l.b16 %v55
  %v120 = vunpack.c.l.b16 %v56
  %v121 = vunpack.c.l.b16 %v57
  %v122 = vunpack.c.l.b16 %v58
  %v123 = vunpack.c.l.b16 %v59
  %v124 = vunpack.c.l.b16 %v60
  %v125 = vunpack.c.l.b16 %v61
  %v126 = vunpack.c.l.b16 %v62
  %v127 = vunpack.c.l.b16 %v63
  %v128 = vunpack.c.l.b16 %v64
  %v129 = vunpack.c.l.b16 %v65
  %v130 = vunpack.c.l.b16 %v66
  %v131 = vpack.c.b16 %v116, %v115
  %v132 = vpack.c.b16 %v118, %v117
  %v133 = vpack.c.b16 %v120, %v119
  %v134 = vpack.c.b16 %v122, %v121
  %v135 = vpack.c.b16 %v124, %v123
  %v136 = vpack.c.b16 %v126, %v125
  %v137 = vpack.c.b16 %v128, %v127
  %v138 = vpack.c.b16 %v130, %v129
  %v163 = vunpack.c.l.b16 %v83
  %v164 = vunpack.c.l.b16 %v84
  %v165 = vunpack.c.l.b16 %v85
  %v166 = vunpack.c.l.b16 %v86
  %v167 = vunpack.c.l.b16 %v87
  %v168 = vunpack.c.l.b16 %v88
  %v169 = vunpack.c.l.b16 %v89
  %v170 = vunpack.c.l.b16 %v90
  %v171 = vunpack.c.l.b16 %v91
  %v172 = vunpack.c.l.b16 %v92
  %v173 = vunpack.c.l.b16 %v93
  %v174 = vunpack.c.l.b16 %v94
  %v175 = vunpack.c.l.b16 %v95
  %v176 = vunpack.c.l.b16 %v96
  %v177 = vunpack.c.l.b16 %v97
  %v178 = vunpack.c.l.b16 %v98
  %v179 = vpack.c.b16 %v164, %v163
  %v180 = vpack.c.b16 %v166, %v165
  %v181 = vpack.c.b16 %v168, %v167
  %v182 = vpack.c.b16 %v170, %v169
  %v183 = vpack.c.b16 %v172, %v171
  %v184 = vpack.c.b16 %v174, %v173
  %v185 = vpack.c.b16 %v176, %v175
  %v186 = vpack.c.b16 %v178, %v177
  %195 = vmatprep.subr.bf16.mxu0 0
  %196 = vmatpush1.bf16.msra.mxu0 %v179
  %197 = vmatprep.subr.bf16.mxu0 0
  %198 = vmatpush1.bf16.msra.mxu0 %v180
  %199 = vmatprep.subr.bf16.mxu0 0
  %200 = vmatpush1.bf16.msra.mxu0 %v181
  %201 = vmatprep.subr.bf16.mxu0 0
  %202 = vmatpush1.bf16.msra.mxu0 %v182
  %203 = vmatprep.subr.bf16.mxu0 0
  %204 = vmatpush1.bf16.msra.mxu0 %v183
  %205 = vmatprep.subr.bf16.mxu0 0
  %206 = vmatpush1.bf16.msra.mxu0 %v184
  %207 = vmatprep.subr.bf16.mxu0 0
  %208 = vmatpush1.bf16.msra.mxu0 %v185
  %209 = vmatprep.subr.bf16.mxu0 0
  %210 = vmatpush1.bf16.msra.mxu0 %v186
  %211 = vmatprep.subr.bf16.mxu0 0
  %212 = vmatpush1.bf16.msra.mxu0 0
  %213 = vmatprep.subr.bf16.mxu0 0
  %214 = vmatpush1.bf16.msra.mxu0 0
  %215 = vmatprep.subr.bf16.mxu0 0
  %216 = vmatpush1.bf16.msra.mxu0 0
  %217 = vmatprep.subr.bf16.mxu0 0
  %218 = vmatpush1.bf16.msra.mxu0 0
  %219 = vmatprep.subr.bf16.mxu0 0
  %220 = vmatpush1.bf16.msra.mxu0 0
  %221 = vmatprep.subr.bf16.mxu0 0
  %222 = vmatpush1.bf16.msra.mxu0 0
  %223 = vmatprep.subr.bf16.mxu0 0
  %224 = vmatpush1.bf16.msra.mxu0 0
  %225 = vmatprep.subr.bf16.mxu0 0
  %226 = vmatpush1.bf16.msra.mxu0 0
  %227 = vmatprep.mubr.bf16.mxu0 0
  %228 = vmatmul.mubr.bf16.gmra.mrb[0].mxu0 %v131
  %v229 = vpop.f32.mrb[0].mxu0
  %v230 = vadd.f32 0.0, %v229
  %v231 = vpop.f32.mrb[0].mxu0
  %v232 = vpop.f32.mrb[0].mxu0
  %v233 = vadd.f32 0.0, %v232
  %v234 = vpop.f32.mrb[0].mxu0
  %235 = vmatprep.mubr.bf16.mxu0 0
  %236 = vmatmul.mubr.bf16.gmra.mrb[0].mxu0 %v132
  %v237 = vpop.f32.mrb[0].mxu0
  %v238 = vadd.f32 0.0, %v237
  %v239 = vpop.f32.mrb[0].mxu0
  %v240 = vpop.f32.mrb[0].mxu0
  %v241 = vadd.f32 0.0, %v240
  %v242 = vpop.f32.mrb[0].mxu0
  %243 = vmatprep.mubr.bf16.mxu0 0
  %244 = vmatmul.mubr.bf16.gmra.mrb[0].mxu0 %v133
  %v245 = vpop.f32.mrb[0].mxu0
  %v246 = vadd.f32 0.0, %v245
  %v247 = vpop.f32.mrb[0].mxu0
  %v248 = vpop.f32.mrb[0].mxu0
  %v249 = vadd.f32 0.0, %v248
  %v250 = vpop.f32.mrb[0].mxu0
  %251 = vmatprep.mubr.bf16.mxu0 0
  %252 = vmatmul.mubr.bf16.gmra.mrb[0].mxu0 %v134
  %v253 = vpop.f32.mrb[0].mxu0
  %v254 = vadd.f32 0.0, %v253
  %v255 = vpop.f32.mrb[0].mxu0
  %v256 = vpop.f32.mrb[0].mxu0
  %v257 = vadd.f32 0.0, %v256
  %v258 = vpop.f32.mrb[0].mxu0
  %259 = vmatprep.mubr.bf16.mxu0 0
  %260 = vmatmul.mubr.bf16.gmra.mrb[0].mxu0 %v135
  %v261 = vpop.f32.mrb[0].mxu0
  %v262 = vadd.f32 0.0, %v261
  %v263 = vpop.f32.mrb[0].mxu0
  %v264 = vpop.f32.mrb[0].mxu0
  %v265 = vadd.f32 0.0, %v264
  %v266 = vpop.f32.mrb[0].mxu0
  %267 = vmatprep.mubr.bf16.mxu0 0
  %268 = vmatmul.mubr.bf16.gmra.mrb[0].mxu0 %v136
  %v269 = vpop.f32.mrb[0].mxu0
  %v270 = vadd.f32 0.0, %v269
  %v271 = vpop.f32.mrb[0].mxu0
  %v272 = vpop.f32.mrb[0].mxu0
  %v273 = vadd.f32 0.0, %v272
  %v274 = vpop.f32.mrb[0].mxu0
  %275 = vmatprep.mubr.bf16.mxu0 0
  %276 = vmatmul.mubr.bf16.gmra.mrb[0].mxu0 %v137
  %v277 = vpop.f32.mrb[0].mxu0
  %v278 = vadd.f32 0.0, %v277
  %v279 = vpop.f32.mrb[0].mxu0
  %v280 = vpop.f32.mrb[0].mxu0
  %v281 = vadd.f32 0.0, %v280
  %v282 = vpop.f32.mrb[0].mxu0
  %283 = vmatprep.mubr.bf16.mxu0 0
  %284 = vmatmul.mubr.bf16.gmra.mrb[0].mxu0 %v138
  %v285 = vpop.f32.mrb[0].mxu0
  %v286 = vadd.f32 0.0, %v285
  %v287 = vpop.f32.mrb[0].mxu0
  %v288 = vpop.f32.mrb[0].mxu0
  %v289 = vadd.f32 0.0, %v288
  %v290 = vpop.f32.mrb[0].mxu0
  %291 = vdwg.mxu0
  %v292 = vadd.f32 %v67, %v230
  %v293 = vadd.f32 %v68, %v233
  %v294 = vadd.f32 %v69, %v238
  %v295 = vadd.f32 %v70, %v241
  %v296 = vadd.f32 %v71, %v246
  %v297 = vadd.f32 %v72, %v249
  %v298 = vadd.f32 %v73, %v254
  %v299 = vadd.f32 %v74, %v257
  %v300 = vadd.f32 %v75, %v262
  %v301 = vadd.f32 %v76, %v265
  %v302 = vadd.f32 %v77, %v270
  %v303 = vadd.f32 %v78, %v273
  %v304 = vadd.f32 %v79, %v278
  %v305 = vadd.f32 %v80, %v281
  %v306 = vadd.f32 %v81, %v286
  %v307 = vadd.f32 %v82, %v289
  %308 = vst [vmem:[#allocation2] sm:$0xff] %v292
  %309 = vst [vmem:[#allocation2 + $0x8] sm:$0xff] %v293
  %310 = vst [vmem:[#allocation2 + $0x10] sm:$0xff] %v294
  %311 = vst [vmem:[#allocation2 + $0x18] sm:$0xff] %v295
  %312 = vst [vmem:[#allocation2 + $0x20] sm:$0xff] %v296
  %313 = vst [vmem:[#allocation2 + $0x28] sm:$0xff] %v297
  %314 = vst [vmem:[#allocation2 + $0x30] sm:$0xff] %v298
  %315 = vst [vmem:[#allocation2 + $0x38] sm:$0xff] %v299
  %316 = vst [vmem:[#allocation2 + $0x40] sm:$0xff] %v300
  %317 = vst [vmem:[#allocation2 + $0x48] sm:$0xff] %v301
  %318 = vst [vmem:[#allocation2 + $0x50] sm:$0xff] %v302
  %319 = vst [vmem:[#allocation2 + $0x58] sm:$0xff] %v303
  %320 = vst [vmem:[#allocation2 + $0x60] sm:$0xff] %v304
  %321 = vst [vmem:[#allocation2 + $0x68] sm:$0xff] %v305
  %322 = vst [vmem:[#allocation2 + $0x70] sm:$0xff] %v306
  %323 = vst [vmem:[#allocation2 + $0x78] sm:$0xff] %v307
  // Predicated region
  $region18: #{vgae_encoder.3} parent=0 // pred_check
    %p324 = pneg %p15
  $region19: #{vgae_encoder.3} parent=0 // pred_check_branch
    %326 = sbr.rel (%p324) target = $region21
  $region20: #{vgae_encoder.3} parent=0 // pred_region
    %v327 = vld [vmem:[#allocation2] sm:$0xff]
    %v328 = vld [vmem:[#allocation2 + $0x8] sm:$0xff]
    %v329 = vld [vmem:[#allocation2 + $0x10] sm:$0xff]
    %v330 = vld [vmem:[#allocation2 + $0x18] sm:$0xff]
    %v331 = vld [vmem:[#allocation2 + $0x20] sm:$0xff]
    %v332 = vld [vmem:[#allocation2 + $0x28] sm:$0xff]
    %v333 = vld [vmem:[#allocation2 + $0x30] sm:$0xff]
    %v334 = vld [vmem:[#allocation2 + $0x38] sm:$0xff]
    %v335 = vld [vmem:[#allocation2 + $0x40] sm:$0xff]
    %v336 = vld [vmem:[#allocation2 + $0x48] sm:$0xff]
    %v337 = vld [vmem:[#allocation2 + $0x50] sm:$0xff]
    %v338 = vld [vmem:[#allocation2 + $0x58] sm:$0xff]
    %v339 = vld [vmem:[#allocation2 + $0x60] sm:$0xff]
    %v340 = vld [vmem:[#allocation2 + $0x68] sm:$0xff]
    %v341 = vld [vmem:[#allocation2 + $0x70] sm:$0xff]
    %v342 = vld [vmem:[#allocation2 + $0x78] sm:$0xff]
    %v343 = vld [vmem:[%s1] sm:$0xff]
    %v344 = vld [vmem:[%s1 + $0x8] sm:$0xff]
    %v345 = vld [vmem:[%s1 + $0x10] sm:$0xff]
    %v346 = vld [vmem:[%s1 + $0x18] sm:$0xff]
    %v347 = vld [vmem:[%s1 + $0x20] sm:$0xff]
    %v348 = vld [vmem:[%s1 + $0x28] sm:$0xff]
    %v349 = vld [vmem:[%s1 + $0x30] sm:$0xff]
    %v350 = vld [vmem:[%s1 + $0x38] sm:$0xff]
    %v351 = vld [vmem:[%s1 + $0x40] sm:$0xff]
    %v352 = vld [vmem:[%s1 + $0x48] sm:$0xff]
    %v353 = vld [vmem:[%s1 + $0x50] sm:$0xff]
    %v354 = vld [vmem:[%s1 + $0x58] sm:$0xff]
    %v355 = vld [vmem:[%s1 + $0x60] sm:$0xff]
    %v356 = vld [vmem:[%s1 + $0x68] sm:$0xff]
    %v357 = vld [vmem:[%s1 + $0x70] sm:$0xff]
    %v358 = vld [vmem:[%s1 + $0x78] sm:$0xff]
    %360 = vset.pattern.permute.xlu0 0
    %361 = vperm.xlu0 %360, %v343
    %v362 = vpop.permute.xlu0 %361
    %365 = vset.pattern.permute.xlu0 0
    %366 = vperm.xlu0 %365, %v344
    %v367 = vpop.permute.xlu0 %366
    %370 = vset.pattern.permute.xlu0 0
    %371 = vperm.xlu0 %370, %v345
    %v372 = vpop.permute.xlu0 %371
    %375 = vset.pattern.permute.xlu0 0
    %376 = vperm.xlu0 %375, %v346
    %v377 = vpop.permute.xlu0 %376
    %380 = vset.pattern.permute.xlu0 0
    %381 = vperm.xlu0 %380, %v347
    %v382 = vpop.permute.xlu0 %381
    %385 = vset.pattern.permute.xlu0 0
    %386 = vperm.xlu0 %385, %v348
    %v387 = vpop.permute.xlu0 %386
    %390 = vset.pattern.permute.xlu0 0
    %391 = vperm.xlu0 %390, %v349
    %v392 = vpop.permute.xlu0 %391
    %395 = vset.pattern.permute.xlu0 0
    %396 = vperm.xlu0 %395, %v350
    %v397 = vpop.permute.xlu0 %396
    %400 = vset.pattern.permute.xlu0 0
    %401 = vperm.xlu0 %400, %v351
    %v402 = vpop.permute.xlu0 %401
    %405 = vset.pattern.permute.xlu0 0
    %406 = vperm.xlu0 %405, %v352
    %v407 = vpop.permute.xlu0 %406
    %410 = vset.pattern.permute.xlu0 0
    %411 = vperm.xlu0 %410, %v353
    %v412 = vpop.permute.xlu0 %411
    %415 = vset.pattern.permute.xlu0 0
    %416 = vperm.xlu0 %415, %v354
    %v417 = vpop.permute.xlu0 %416
    %420 = vset.pattern.permute.xlu0 0
    %421 = vperm.xlu0 %420, %v355
    %v422 = vpop.permute.xlu0 %421
    %425 = vset.pattern.permute.xlu0 0
    %426 = vperm.xlu0 %425, %v356
    %v427 = vpop.permute.xlu0 %426
    %430 = vset.pattern.permute.xlu0 0
    %431 = vperm.xlu0 %430, %v357
    %v432 = vpop.permute.xlu0 %431
    %435 = vset.pattern.permute.xlu0 0
    %436 = vperm.xlu0 %435, %v358
    %v437 = vpop.permute.xlu0 %436
    %v439 = vmul.f32 %v327, %v362
    %v440 = vmul.f32 %v328, %v367
    %v441 = vmul.f32 %v329, %v372
    %v442 = vmul.f32 %v330, %v377
    %v443 = vmul.f32 %v331, %v382
    %v444 = vmul.f32 %v332, %v387
    %v445 = vmul.f32 %v333, %v392
    %v446 = vmul.f32 %v334, %v397
    %v447 = vmul.f32 %v335, %v402
    %v448 = vmul.f32 %v336, %v407
    %v449 = vmul.f32 %v337, %v412
    %v450 = vmul.f32 %v338, %v417
    %v451 = vmul.f32 %v339, %v422
    %v452 = vmul.f32 %v340, %v427
    %v453 = vmul.f32 %v341, %v432
    %v454 = vmul.f32 %v342, %v437
    %455 = vst [vmem:[%s3] sm:$0xff] %v439
    %456 = vst [vmem:[%s3 + $0x8] sm:$0xff] %v440
    %457 = vst [vmem:[%s3 + $0x10] sm:$0xff] %v441
    %458 = vst [vmem:[%s3 + $0x18] sm:$0xff] %v442
    %459 = vst [vmem:[%s3 + $0x20] sm:$0xff] %v443
    %460 = vst [vmem:[%s3 + $0x28] sm:$0xff] %v444
    %461 = vst [vmem:[%s3 + $0x30] sm:$0xff] %v445
    %462 = vst [vmem:[%s3 + $0x38] sm:$0xff] %v446
    %463 = vst [vmem:[%s3 + $0x40] sm:$0xff] %v447
    %464 = vst [vmem:[%s3 + $0x48] sm:$0xff] %v448
    %465 = vst [vmem:[%s3 + $0x50] sm:$0xff] %v449
    %466 = vst [vmem:[%s3 + $0x58] sm:$0xff] %v450
    %467 = vst [vmem:[%s3 + $0x60] sm:$0xff] %v451
    %468 = vst [vmem:[%s3 + $0x68] sm:$0xff] %v452
    %469 = vst [vmem:[%s3 + $0x70] sm:$0xff] %v453
    %470 = vst [vmem:[%s3 + $0x78] sm:$0xff] %v454
  $region21: #{vgae_encoder.3} parent=0 // pred_fallthru
    _
  // Predicated region
  $region22: #{vgae_encoder.3} parent=0 // pred_check
    _
  $region23: #{vgae_encoder.3} parent=0 // pred_check_branch
    %472 = sbr.rel (0) target = $region25
  $region24: #{vgae_encoder.3} parent=0 // pred_region
    _
  $region25: #{vgae_encoder.3} parent=0 // pred_fallthru
    _
  // Predicated region
  $region26: #{vgae_encoder.3} parent=0 // pred_check
    _
  $region27: #{vgae_encoder.3} parent=0 // pred_check_branch
    %474 = sbr.rel (0) target = $region29
  $region28: #{vgae_encoder.3} parent=0 // pred_region
    _
  $region29: #{vgae_encoder.3} parent=0 // pred_fallthru
    _

// kernel: vgae_encoder.2
$region0: #{vgae_encoder.2}
  #allocation0 [shape = 'u32[]', space=smem, size = 0x4, offset = 0x4, fixed_abs, tag = 'smem constant byte address 0x4 - core index']
  #allocation1 [shape = 'u32[144,128]{1,0:T(1,128)}', space=vmem, size = 0x12000, scoped, tag = 'internal scratch']
  #allocation2 [shape = 'f32[128,128]{1,0:T(8,128)}', space=vmem, size = 0x10000, scoped, tag = 'scratch operand']
  %s0 = inlined_call_operand.vmem [shape: s8[128,128], index: 0, kind: input, shape index: {}]
  %s1 = inlined_call_operand.vmem [shape: f32[128,1], index: 1, kind: input, shape index: {}]
  %s2 = inlined_call_operand.vmem [shape: bf16[128,128], index: 2, kind: input, shape index: {}]
  %s3 = inlined_call_operand.vmem [shape: bf16[128,128], index: 3, kind: input, shape index: {}]
  %s4 = inlined_call_operand.vmem [shape: bf16[128,128], index: 4, kind: output, shape index: {}]
  %s5 = sld [smem:[#allocation0]]
  $region34: #{vgae_encoder.2} parent=0
    _
  %s7 = ssub.s32 1, %s5
  %s8 = scalar_select 0, %s7, %s5
  // Predicated region
  $region2: #{vgae_encoder.2} parent=0 // pred_check
    _
  $region3: #{vgae_encoder.2} parent=0 // pred_check_branch
    %10 = sbr.rel (0) target = $region5
  $region4: #{vgae_encoder.2} parent=0 // pred_region
    _
  $region5: #{vgae_encoder.2} parent=0 // pred_fallthru
    _
  // Predicated region
  $region6: #{vgae_encoder.2} parent=0 // pred_check
    _
  $region7: #{vgae_encoder.2} parent=0 // pred_check_branch
    %12 = sbr.rel (0) target = $region9
  $region8: #{vgae_encoder.2} parent=0 // pred_region
    _
  $region9: #{vgae_encoder.2} parent=0 // pred_fallthru
    _
  // Predicated region
  $region10: #{vgae_encoder.2} parent=0 // pred_check
    _
  $region11: #{vgae_encoder.2} parent=0 // pred_check_branch
    %14 = sbr.rel (0) target = $region13
  $region12: #{vgae_encoder.2} parent=0 // pred_region
    _
  $region13: #{vgae_encoder.2} parent=0 // pred_fallthru
    _
  // Predicated region
  $region14: #{vgae_encoder.2} parent=0 // pred_check
    _
  $region15: #{vgae_encoder.2} parent=0 // pred_check_branch
    %16 = sbr.rel (0) target = $region17
  $region16: #{vgae_encoder.2} parent=0 // pred_region
    _
  $region17: #{vgae_encoder.2} parent=0 // pred_fallthru
    _
  %p18 = scmp.eq.s32.totalorder 0, 0
  // Predicated region
  $region18: #{vgae_encoder.2} parent=0 // pred_check
    %p19 = pneg %p18
  $region19: #{vgae_encoder.2} parent=0 // pred_check_branch
    %21 = sbr.rel (%p19) target = $region21
  $region20: #{vgae_encoder.2} parent=0 // pred_region
    %22 = vst [vmem:[#allocation2] sm:$0xff] 0.0
    %23 = vst [vmem:[#allocation2 + $0x8] sm:$0xff] 0.0
    %24 = vst [vmem:[#allocation2 + $0x10] sm:$0xff] 0.0
    %25 = vst [vmem:[#allocation2 + $0x18] sm:$0xff] 0.0
    %26 = vst [vmem:[#allocation2 + $0x20] sm:$0xff] 0.0
    %27 = vst [vmem:[#allocation2 + $0x28] sm:$0xff] 0.0
    %28 = vst [vmem:[#allocation2 + $0x30] sm:$0xff] 0.0
    %29 = vst [vmem:[#allocation2 + $0x38] sm:$0xff] 0.0
    %30 = vst [vmem:[#allocation2 + $0x40] sm:$0xff] 0.0
    %31 = vst [vmem:[#allocation2 + $0x48] sm:$0xff] 0.0
    %32 = vst [vmem:[#allocation2 + $0x50] sm:$0xff] 0.0
    %33 = vst [vmem:[#allocation2 + $0x58] sm:$0xff] 0.0
    %34 = vst [vmem:[#allocation2 + $0x60] sm:$0xff] 0.0
    %35 = vst [vmem:[#allocation2 + $0x68] sm:$0xff] 0.0
    %36 = vst [vmem:[#allocation2 + $0x70] sm:$0xff] 0.0
    %37 = vst [vmem:[#allocation2 + $0x78] sm:$0xff] 0.0
  $region21: #{vgae_encoder.2} parent=0 // pred_fallthru
    _
  %v38 = vld [vmem:[%s0] sm:$0x3]
  %v39 = vld [vmem:[%s0 + $0x2] sm:$0x3]
  %v40 = vld [vmem:[%s0 + $0x4] sm:$0x3]
  %v41 = vld [vmem:[%s0 + $0x6] sm:$0x3]
  %v42 = vld [vmem:[%s0 + $0x8] sm:$0x3]
  %v43 = vld [vmem:[%s0 + $0xa] sm:$0x3]
  %v44 = vld [vmem:[%s0 + $0xc] sm:$0x3]
  %v45 = vld [vmem:[%s0 + $0xe] sm:$0x3]
  %v46 = vld [vmem:[%s0 + $0x10] sm:$0x3]
  %v47 = vld [vmem:[%s0 + $0x12] sm:$0x3]
  %v48 = vld [vmem:[%s0 + $0x14] sm:$0x3]
  %v49 = vld [vmem:[%s0 + $0x16] sm:$0x3]
  %v50 = vld [vmem:[%s0 + $0x18] sm:$0x3]
  %v51 = vld [vmem:[%s0 + $0x1a] sm:$0x3]
  %v52 = vld [vmem:[%s0 + $0x1c] sm:$0x3]
  %v53 = vld [vmem:[%s0 + $0x1e] sm:$0x3]
  %v54 = vunpack.c.l.s8.bf16 %v38
  %v55 = vunpack.c.l.s8.bf16 %v39
  %v56 = vunpack.c.l.s8.bf16 %v40
  %v57 = vunpack.c.l.s8.bf16 %v41
  %v58 = vunpack.c.l.s8.bf16 %v42
  %v59 = vunpack.c.l.s8.bf16 %v43
  %v60 = vunpack.c.l.s8.bf16 %v44
  %v61 = vunpack.c.l.s8.bf16 %v45
  %v62 = vunpack.c.l.s8.bf16 %v46
  %v63 = vunpack.c.l.s8.bf16 %v47
  %v64 = vunpack.c.l.s8.bf16 %v48
  %v65 = vunpack.c.l.s8.bf16 %v49
  %v66 = vunpack.c.l.s8.bf16 %v50
  %v67 = vunpack.c.l.s8.bf16 %v51
  %v68 = vunpack.c.l.s8.bf16 %v52
  %v69 = vunpack.c.l.s8.bf16 %v53
  %v70 = vld [vmem:[#allocation2] sm:$0xff]
  %v71 = vld [vmem:[#allocation2 + $0x8] sm:$0xff]
  %v72 = vld [vmem:[#allocation2 + $0x10] sm:$0xff]
  %v73 = vld [vmem:[#allocation2 + $0x18] sm:$0xff]
  %v74 = vld [vmem:[#allocation2 + $0x20] sm:$0xff]
  %v75 = vld [vmem:[#allocation2 + $0x28] sm:$0xff]
  %v76 = vld [vmem:[#allocation2 + $0x30] sm:$0xff]
  %v77 = vld [vmem:[#allocation2 + $0x38] sm:$0xff]
  %v78 = vld [vmem:[#allocation2 + $0x40] sm:$0xff]
  %v79 = vld [vmem:[#allocation2 + $0x48] sm:$0xff]
  %v80 = vld [vmem:[#allocation2 + $0x50] sm:$0xff]
  %v81 = vld [vmem:[#allocation2 + $0x58] sm:$0xff]
  %v82 = vld [vmem:[#allocation2 + $0x60] sm:$0xff]
  %v83 = vld [vmem:[#allocation2 + $0x68] sm:$0xff]
  %v84 = vld [vmem:[#allocation2 + $0x70] sm:$0xff]
  %v85 = vld [vmem:[#allocation2 + $0x78] sm:$0xff]
  %v86 = vld [vmem:[%s2] sm:$0xf]
  %v87 = vld [vmem:[%s2 + $0x4] sm:$0xf]
  %v88 = vld [vmem:[%s2 + $0x8] sm:$0xf]
  %v89 = vld [vmem:[%s2 + $0xc] sm:$0xf]
  %v90 = vld [vmem:[%s2 + $0x10] sm:$0xf]
  %v91 = vld [vmem:[%s2 + $0x14] sm:$0xf]
  %v92 = vld [vmem:[%s2 + $0x18] sm:$0xf]
  %v93 = vld [vmem:[%s2 + $0x1c] sm:$0xf]
  %v94 = vld [vmem:[%s2 + $0x20] sm:$0xf]
  %v95 = vld [vmem:[%s2 + $0x24] sm:$0xf]
  %v96 = vld [vmem:[%s2 + $0x28] sm:$0xf]
  %v97 = vld [vmem:[%s2 + $0x2c] sm:$0xf]
  %v98 = vld [vmem:[%s2 + $0x30] sm:$0xf]
  %v99 = vld [vmem:[%s2 + $0x34] sm:$0xf]
  %v100 = vld [vmem:[%s2 + $0x38] sm:$0xf]
  %v101 = vld [vmem:[%s2 + $0x3c] sm:$0xf]
  %v118 = vunpack.c.l.b16 %v54
  %v119 = vunpack.c.l.b16 %v55
  %v120 = vunpack.c.l.b16 %v56
  %v121 = vunpack.c.l.b16 %v57
  %v122 = vunpack.c.l.b16 %v58
  %v123 = vunpack.c.l.b16 %v59
  %v124 = vunpack.c.l.b16 %v60
  %v125 = vunpack.c.l.b16 %v61
  %v126 = vunpack.c.l.b16 %v62
  %v127 = vunpack.c.l.b16 %v63
  %v128 = vunpack.c.l.b16 %v64
  %v129 = vunpack.c.l.b16 %v65
  %v130 = vunpack.c.l.b16 %v66
  %v131 = vunpack.c.l.b16 %v67
  %v132 = vunpack.c.l.b16 %v68
  %v133 = vunpack.c.l.b16 %v69
  %v134 = vpack.c.b16 %v119, %v118
  %v135 = vpack.c.b16 %v121, %v120
  %v136 = vpack.c.b16 %v123, %v122
  %v137 = vpack.c.b16 %v125, %v124
  %v138 = vpack.c.b16 %v127, %v126
  %v139 = vpack.c.b16 %v129, %v128
  %v140 = vpack.c.b16 %v131, %v130
  %v141 = vpack.c.b16 %v133, %v132
  %v166 = vunpack.c.l.b16 %v86
  %v167 = vunpack.c.l.b16 %v87
  %v168 = vunpack.c.l.b16 %v88
  %v169 = vunpack.c.l.b16 %v89
  %v170 = vunpack.c.l.b16 %v90
  %v171 = vunpack.c.l.b16 %v91
  %v172 = vunpack.c.l.b16 %v92
  %v173 = vunpack.c.l.b16 %v93
  %v174 = vunpack.c.l.b16 %v94
  %v175 = vunpack.c.l.b16 %v95
  %v176 = vunpack.c.l.b16 %v96
  %v177 = vunpack.c.l.b16 %v97
  %v178 = vunpack.c.l.b16 %v98
  %v179 = vunpack.c.l.b16 %v99
  %v180 = vunpack.c.l.b16 %v100
  %v181 = vunpack.c.l.b16 %v101
  %v182 = vpack.c.b16 %v167, %v166
  %v183 = vpack.c.b16 %v169, %v168
  %v184 = vpack.c.b16 %v171, %v170
  %v185 = vpack.c.b16 %v173, %v172
  %v186 = vpack.c.b16 %v175, %v174
  %v187 = vpack.c.b16 %v177, %v176
  %v188 = vpack.c.b16 %v179, %v178
  %v189 = vpack.c.b16 %v181, %v180
  %198 = vmatprep.subr.bf16.mxu0 0
  %199 = vmatpush1.bf16.msra.mxu0 %v182
  %200 = vmatprep.subr.bf16.mxu0 0
  %201 = vmatpush1.bf16.msra.mxu0 %v183
  %202 = vmatprep.subr.bf16.mxu0 0
  %203 = vmatpush1.bf16.msra.mxu0 %v184
  %204 = vmatprep.subr.bf16.mxu0 0
  %205 = vmatpush1.bf16.msra.mxu0 %v185
  %206 = vmatprep.subr.bf16.mxu0 0
  %207 = vmatpush1.bf16.msra.mxu0 %v186
  %208 = vmatprep.subr.bf16.mxu0 0
  %209 = vmatpush1.bf16.msra.mxu0 %v187
  %210 = vmatprep.subr.bf16.mxu0 0
  %211 = vmatpush1.bf16.msra.mxu0 %v188
  %212 = vmatprep.subr.bf16.mxu0 0
  %213 = vmatpush1.bf16.msra.mxu0 %v189
  %214 = vmatprep.subr.bf16.mxu0 0
  %215 = vmatpush1.bf16.msra.mxu0 0
  %216 = vmatprep.subr.bf16.mxu0 0
  %217 = vmatpush1.bf16.msra.mxu0 0
  %218 = vmatprep.subr.bf16.mxu0 0
  %219 = vmatpush1.bf16.msra.mxu0 0
  %220 = vmatprep.subr.bf16.mxu0 0
  %221 = vmatpush1.bf16.msra.mxu0 0
  %222 = vmatprep.subr.bf16.mxu0 0
  %223 = vmatpush1.bf16.msra.mxu0 0
  %224 = vmatprep.subr.bf16.mxu0 0
  %225 = vmatpush1.bf16.msra.mxu0 0
  %226 = vmatprep.subr.bf16.mxu0 0
  %227 = vmatpush1.bf16.msra.mxu0 0
  %228 = vmatprep.subr.bf16.mxu0 0
  %229 = vmatpush1.bf16.msra.mxu0 0
  %230 = vmatprep.mubr.bf16.mxu0 0
  %231 = vmatmul.mubr.bf16.gmra.mrb[0].mxu0 %v134
  %v232 = vpop.f32.mrb[0].mxu0
  %v233 = vadd.f32 0.0, %v232
  %v234 = vpop.f32.mrb[0].mxu0
  %v235 = vpop.f32.mrb[0].mxu0
  %v236 = vadd.f32 0.0, %v235
  %v237 = vpop.f32.mrb[0].mxu0
  %238 = vmatprep.mubr.bf16.mxu0 0
  %239 = vmatmul.mubr.bf16.gmra.mrb[0].mxu0 %v135
  %v240 = vpop.f32.mrb[0].mxu0
  %v241 = vadd.f32 0.0, %v240
  %v242 = vpop.f32.mrb[0].mxu0
  %v243 = vpop.f32.mrb[0].mxu0
  %v244 = vadd.f32 0.0, %v243
  %v245 = vpop.f32.mrb[0].mxu0
  %246 = vmatprep.mubr.bf16.mxu0 0
  %247 = vmatmul.mubr.bf16.gmra.mrb[0].mxu0 %v136
  %v248 = vpop.f32.mrb[0].mxu0
  %v249 = vadd.f32 0.0, %v248
  %v250 = vpop.f32.mrb[0].mxu0
  %v251 = vpop.f32.mrb[0].mxu0
  %v252 = vadd.f32 0.0, %v251
  %v253 = vpop.f32.mrb[0].mxu0
  %254 = vmatprep.mubr.bf16.mxu0 0
  %255 = vmatmul.mubr.bf16.gmra.mrb[0].mxu0 %v137
  %v256 = vpop.f32.mrb[0].mxu0
  %v257 = vadd.f32 0.0, %v256
  %v258 = vpop.f32.mrb[0].mxu0
  %v259 = vpop.f32.mrb[0].mxu0
  %v260 = vadd.f32 0.0, %v259
  %v261 = vpop.f32.mrb[0].mxu0
  %262 = vmatprep.mubr.bf16.mxu0 0
  %263 = vmatmul.mubr.bf16.gmra.mrb[0].mxu0 %v138
  %v264 = vpop.f32.mrb[0].mxu0
  %v265 = vadd.f32 0.0, %v264
  %v266 = vpop.f32.mrb[0].mxu0
  %v267 = vpop.f32.mrb[0].mxu0
  %v268 = vadd.f32 0.0, %v267
  %v269 = vpop.f32.mrb[0].mxu0
  %270 = vmatprep.mubr.bf16.mxu0 0
  %271 = vmatmul.mubr.bf16.gmra.mrb[0].mxu0 %v139
  %v272 = vpop.f32.mrb[0].mxu0
  %v273 = vadd.f32 0.0, %v272
  %v274 = vpop.f32.mrb[0].mxu0
  %v275 = vpop.f32.mrb[0].mxu0
  %v276 = vadd.f32 0.0, %v275
  %v277 = vpop.f32.mrb[0].mxu0
  %278 = vmatprep.mubr.bf16.mxu0 0
  %279 = vmatmul.mubr.bf16.gmra.mrb[0].mxu0 %v140
  %v280 = vpop.f32.mrb[0].mxu0
  %v281 = vadd.f32 0.0, %v280
  %v282 = vpop.f32.mrb[0].mxu0
  %v283 = vpop.f32.mrb[0].mxu0
  %v284 = vadd.f32 0.0, %v283
  %v285 = vpop.f32.mrb[0].mxu0
  %286 = vmatprep.mubr.bf16.mxu0 0
  %287 = vmatmul.mubr.bf16.gmra.mrb[0].mxu0 %v141
  %v288 = vpop.f32.mrb[0].mxu0
  %v289 = vadd.f32 0.0, %v288
  %v290 = vpop.f32.mrb[0].mxu0
  %v291 = vpop.f32.mrb[0].mxu0
  %v292 = vadd.f32 0.0, %v291
  %v293 = vpop.f32.mrb[0].mxu0
  %294 = vdwg.mxu0
  %v295 = vadd.f32 %v70, %v233
  %v296 = vadd.f32 %v71, %v236
  %v297 = vadd.f32 %v72, %v241
  %v298 = vadd.f32 %v73, %v244
  %v299 = vadd.f32 %v74, %v249
  %v300 = vadd.f32 %v75, %v252
  %v301 = vadd.f32 %v76, %v257
  %v302 = vadd.f32 %v77, %v260
  %v303 = vadd.f32 %v78, %v265
  %v304 = vadd.f32 %v79, %v268
  %v305 = vadd.f32 %v80, %v273
  %v306 = vadd.f32 %v81, %v276
  %v307 = vadd.f32 %v82, %v281
  %v308 = vadd.f32 %v83, %v284
  %v309 = vadd.f32 %v84, %v289
  %v310 = vadd.f32 %v85, %v292
  %311 = vst [vmem:[#allocation2] sm:$0xff] %v295
  %312 = vst [vmem:[#allocation2 + $0x8] sm:$0xff] %v296
  %313 = vst [vmem:[#allocation2 + $0x10] sm:$0xff] %v297
  %314 = vst [vmem:[#allocation2 + $0x18] sm:$0xff] %v298
  %315 = vst [vmem:[#allocation2 + $0x20] sm:$0xff] %v299
  %316 = vst [vmem:[#allocation2 + $0x28] sm:$0xff] %v300
  %317 = vst [vmem:[#allocation2 + $0x30] sm:$0xff] %v301
  %318 = vst [vmem:[#allocation2 + $0x38] sm:$0xff] %v302
  %319 = vst [vmem:[#allocation2 + $0x40] sm:$0xff] %v303
  %320 = vst [vmem:[#allocation2 + $0x48] sm:$0xff] %v304
  %321 = vst [vmem:[#allocation2 + $0x50] sm:$0xff] %v305
  %322 = vst [vmem:[#allocation2 + $0x58] sm:$0xff] %v306
  %323 = vst [vmem:[#allocation2 + $0x60] sm:$0xff] %v307
  %324 = vst [vmem:[#allocation2 + $0x68] sm:$0xff] %v308
  %325 = vst [vmem:[#allocation2 + $0x70] sm:$0xff] %v309
  %326 = vst [vmem:[#allocation2 + $0x78] sm:$0xff] %v310
  // Predicated region
  $region22: #{vgae_encoder.2} parent=0 // pred_check
    %p327 = pneg %p18
  $region23: #{vgae_encoder.2} parent=0 // pred_check_branch
    %329 = sbr.rel (%p327) target = $region25
  $region24: #{vgae_encoder.2} parent=0 // pred_region
    %v330 = vld [vmem:[%s1] sm:$0xff]
    %v331 = vld [vmem:[%s1 + $0x8] sm:$0xff]
    %v332 = vld [vmem:[%s1 + $0x10] sm:$0xff]
    %v333 = vld [vmem:[%s1 + $0x18] sm:$0xff]
    %v334 = vld [vmem:[%s1 + $0x20] sm:$0xff]
    %v335 = vld [vmem:[%s1 + $0x28] sm:$0xff]
    %v336 = vld [vmem:[%s1 + $0x30] sm:$0xff]
    %v337 = vld [vmem:[%s1 + $0x38] sm:$0xff]
    %v338 = vld [vmem:[%s1 + $0x40] sm:$0xff]
    %v339 = vld [vmem:[%s1 + $0x48] sm:$0xff]
    %v340 = vld [vmem:[%s1 + $0x50] sm:$0xff]
    %v341 = vld [vmem:[%s1 + $0x58] sm:$0xff]
    %v342 = vld [vmem:[%s1 + $0x60] sm:$0xff]
    %v343 = vld [vmem:[%s1 + $0x68] sm:$0xff]
    %v344 = vld [vmem:[%s1 + $0x70] sm:$0xff]
    %v345 = vld [vmem:[%s1 + $0x78] sm:$0xff]
    %v346 = vld [vmem:[#allocation2] sm:$0xff]
    %v347 = vld [vmem:[#allocation2 + $0x8] sm:$0xff]
    %v348 = vld [vmem:[#allocation2 + $0x10] sm:$0xff]
    %v349 = vld [vmem:[#allocation2 + $0x18] sm:$0xff]
    %v350 = vld [vmem:[#allocation2 + $0x20] sm:$0xff]
    %v351 = vld [vmem:[#allocation2 + $0x28] sm:$0xff]
    %v352 = vld [vmem:[#allocation2 + $0x30] sm:$0xff]
    %v353 = vld [vmem:[#allocation2 + $0x38] sm:$0xff]
    %v354 = vld [vmem:[#allocation2 + $0x40] sm:$0xff]
    %v355 = vld [vmem:[#allocation2 + $0x48] sm:$0xff]
    %v356 = vld [vmem:[#allocation2 + $0x50] sm:$0xff]
    %v357 = vld [vmem:[#allocation2 + $0x58] sm:$0xff]
    %v358 = vld [vmem:[#allocation2 + $0x60] sm:$0xff]
    %v359 = vld [vmem:[#allocation2 + $0x68] sm:$0xff]
    %v360 = vld [vmem:[#allocation2 + $0x70] sm:$0xff]
    %v361 = vld [vmem:[#allocation2 + $0x78] sm:$0xff]
    %363 = vset.pattern.permute.xlu0 0
    %364 = vperm.xlu0 %363, %v330
    %v365 = vpop.permute.xlu0 %364
    %368 = vset.pattern.permute.xlu0 0
    %369 = vperm.xlu0 %368, %v331
    %v370 = vpop.permute.xlu0 %369
    %373 = vset.pattern.permute.xlu0 0
    %374 = vperm.xlu0 %373, %v332
    %v375 = vpop.permute.xlu0 %374
    %378 = vset.pattern.permute.xlu0 0
    %379 = vperm.xlu0 %378, %v333
    %v380 = vpop.permute.xlu0 %379
    %383 = vset.pattern.permute.xlu0 0
    %384 = vperm.xlu0 %383, %v334
    %v385 = vpop.permute.xlu0 %384
    %388 = vset.pattern.permute.xlu0 0
    %389 = vperm.xlu0 %388, %v335
    %v390 = vpop.permute.xlu0 %389
    %393 = vset.pattern.permute.xlu0 0
    %394 = vperm.xlu0 %393, %v336
    %v395 = vpop.permute.xlu0 %394
    %398 = vset.pattern.permute.xlu0 0
    %399 = vperm.xlu0 %398, %v337
    %v400 = vpop.permute.xlu0 %399
    %403 = vset.pattern.permute.xlu0 0
    %404 = vperm.xlu0 %403, %v338
    %v405 = vpop.permute.xlu0 %404
    %408 = vset.pattern.permute.xlu0 0
    %409 = vperm.xlu0 %408, %v339
    %v410 = vpop.permute.xlu0 %409
    %413 = vset.pattern.permute.xlu0 0
    %414 = vperm.xlu0 %413, %v340
    %v415 = vpop.permute.xlu0 %414
    %418 = vset.pattern.permute.xlu0 0
    %419 = vperm.xlu0 %418, %v341
    %v420 = vpop.permute.xlu0 %419
    %423 = vset.pattern.permute.xlu0 0
    %424 = vperm.xlu0 %423, %v342
    %v425 = vpop.permute.xlu0 %424
    %428 = vset.pattern.permute.xlu0 0
    %429 = vperm.xlu0 %428, %v343
    %v430 = vpop.permute.xlu0 %429
    %433 = vset.pattern.permute.xlu0 0
    %434 = vperm.xlu0 %433, %v344
    %v435 = vpop.permute.xlu0 %434
    %438 = vset.pattern.permute.xlu0 0
    %439 = vperm.xlu0 %438, %v345
    %v440 = vpop.permute.xlu0 %439
    %v442 = vmul.f32 %v346, %v365
    %v443 = vmul.f32 %v347, %v370
    %v444 = vmul.f32 %v348, %v375
    %v445 = vmul.f32 %v349, %v380
    %v446 = vmul.f32 %v350, %v385
    %v447 = vmul.f32 %v351, %v390
    %v448 = vmul.f32 %v352, %v395
    %v449 = vmul.f32 %v353, %v400
    %v450 = vmul.f32 %v354, %v405
    %v451 = vmul.f32 %v355, %v410
    %v452 = vmul.f32 %v356, %v415
    %v453 = vmul.f32 %v357, %v420
    %v454 = vmul.f32 %v358, %v425
    %v455 = vmul.f32 %v359, %v430
    %v456 = vmul.f32 %v360, %v435
    %v457 = vmul.f32 %v361, %v440
    %v458 = vmax.f32 %v442, 0.0
    %v459 = vmax.f32 %v443, 0.0
    %v460 = vmax.f32 %v444, 0.0
    %v461 = vmax.f32 %v445, 0.0
    %v462 = vmax.f32 %v446, 0.0
    %v463 = vmax.f32 %v447, 0.0
    %v464 = vmax.f32 %v448, 0.0
    %v465 = vmax.f32 %v449, 0.0
    %v466 = vmax.f32 %v450, 0.0
    %v467 = vmax.f32 %v451, 0.0
    %v468 = vmax.f32 %v452, 0.0
    %v469 = vmax.f32 %v453, 0.0
    %v470 = vmax.f32 %v454, 0.0
    %v471 = vmax.f32 %v455, 0.0
    %v472 = vmax.f32 %v456, 0.0
    %v473 = vmax.f32 %v457, 0.0
    %v474 = vmul.f32 %v458, %v365
    %v475 = vmul.f32 %v459, %v370
    %v476 = vmul.f32 %v460, %v375
    %v477 = vmul.f32 %v461, %v380
    %v478 = vmul.f32 %v462, %v385
    %v479 = vmul.f32 %v463, %v390
    %v480 = vmul.f32 %v464, %v395
    %v481 = vmul.f32 %v465, %v400
    %v482 = vmul.f32 %v466, %v405
    %v483 = vmul.f32 %v467, %v410
    %v484 = vmul.f32 %v468, %v415
    %v485 = vmul.f32 %v469, %v420
    %v486 = vmul.f32 %v470, %v425
    %v487 = vmul.f32 %v471, %v430
    %v488 = vmul.f32 %v472, %v435
    %v489 = vmul.f32 %v473, %v440
    %v490 = vpack.c.bf16 %v475, %v474
    %v491 = vpack.c.bf16 %v477, %v476
    %v492 = vpack.c.bf16 %v479, %v478
    %v493 = vpack.c.bf16 %v481, %v480
    %v494 = vpack.c.bf16 %v483, %v482
    %v495 = vpack.c.bf16 %v485, %v484
    %v496 = vpack.c.bf16 %v487, %v486
    %v497 = vpack.c.bf16 %v489, %v488
    %v498 = vld [vmem:[%s3] sm:$0xf]
    %v499 = vld [vmem:[%s3 + $0x4] sm:$0xf]
    %v500 = vld [vmem:[%s3 + $0x8] sm:$0xf]
    %v501 = vld [vmem:[%s3 + $0xc] sm:$0xf]
    %v502 = vld [vmem:[%s3 + $0x10] sm:$0xf]
    %v503 = vld [vmem:[%s3 + $0x14] sm:$0xf]
    %v504 = vld [vmem:[%s3 + $0x18] sm:$0xf]
    %v505 = vld [vmem:[%s3 + $0x1c] sm:$0xf]
    %v506 = vld [vmem:[%s3 + $0x20] sm:$0xf]
    %v507 = vld [vmem:[%s3 + $0x24] sm:$0xf]
    %v508 = vld [vmem:[%s3 + $0x28] sm:$0xf]
    %v509 = vld [vmem:[%s3 + $0x2c] sm:$0xf]
    %v510 = vld [vmem:[%s3 + $0x30] sm:$0xf]
    %v511 = vld [vmem:[%s3 + $0x34] sm:$0xf]
    %v512 = vld [vmem:[%s3 + $0x38] sm:$0xf]
    %v513 = vld [vmem:[%s3 + $0x3c] sm:$0xf]
    %v530 = vunpack.c.l.b16 %v498
    %v531 = vunpack.c.l.b16 %v499
    %v532 = vunpack.c.l.b16 %v500
    %v533 = vunpack.c.l.b16 %v501
    %v534 = vunpack.c.l.b16 %v502
    %v535 = vunpack.c.l.b16 %v503
    %v536 = vunpack.c.l.b16 %v504
    %v537 = vunpack.c.l.b16 %v505
    %v538 = vunpack.c.l.b16 %v506
    %v539 = vunpack.c.l.b16 %v507
    %v540 = vunpack.c.l.b16 %v508
    %v541 = vunpack.c.l.b16 %v509
    %v542 = vunpack.c.l.b16 %v510
    %v543 = vunpack.c.l.b16 %v511
    %v544 = vunpack.c.l.b16 %v512
    %v545 = vunpack.c.l.b16 %v513
    %v546 = vpack.c.b16 %v531, %v530
    %v547 = vpack.c.b16 %v533, %v532
    %v548 = vpack.c.b16 %v535, %v534
    %v549 = vpack.c.b16 %v537, %v536
    %v550 = vpack.c.b16 %v539, %v538
    %v551 = vpack.c.b16 %v541, %v540
    %v552 = vpack.c.b16 %v543, %v542
    %v553 = vpack.c.b16 %v545, %v544
    %562 = vmatprep.subr.bf16.mxu0 0
    %563 = vmatpush1.bf16.msra.mxu0 %v546
    %564 = vmatprep.subr.bf16.mxu0 0
    %565 = vmatpush1.bf16.msra.mxu0 %v547
    %566 = vmatprep.subr.bf16.mxu0 0
    %567 = vmatpush1.bf16.msra.mxu0 %v548
    %568 = vmatprep.subr.bf16.mxu0 0
    %569 = vmatpush1.bf16.msra.mxu0 %v549
    %570 = vmatprep.subr.bf16.mxu0 0
    %571 = vmatpush1.bf16.msra.mxu0 %v550
    %572 = vmatprep.subr.bf16.mxu0 0
    %573 = vmatpush1.bf16.msra.mxu0 %v551
    %574 = vmatprep.subr.bf16.mxu0 0
    %575 = vmatpush1.bf16.msra.mxu0 %v552
    %576 = vmatprep.subr.bf16.mxu0 0
    %577 = vmatpush1.bf16.msra.mxu0 %v553
    %578 = vmatprep.subr.bf16.mxu0 0
    %579 = vmatpush1.bf16.msra.mxu0 0
    %580 = vmatprep.subr.bf16.mxu0 0
    %581 = vmatpush1.bf16.msra.mxu0 0
    %582 = vmatprep.subr.bf16.mxu0 0
    %583 = vmatpush1.bf16.msra.mxu0 0
    %584 = vmatprep.subr.bf16.mxu0 0
    %585 = vmatpush1.bf16.msra.mxu0 0
    %586 = vmatprep.subr.bf16.mxu0 0
    %587 = vmatpush1.bf16.msra.mxu0 0
    %588 = vmatprep.subr.bf16.mxu0 0
    %589 = vmatpush1.bf16.msra.mxu0 0
    %590 = vmatprep.subr.bf16.mxu0 0
    %591 = vmatpush1.bf16.msra.mxu0 0
    %592 = vmatprep.subr.bf16.mxu0 0
    %593 = vmatpush1.bf16.msra.mxu0 0
    %594 = vmatprep.mubr.bf16.mxu0 0
    %595 = vmatmul.mubr.bf16.gmra.mrb[0].mxu0 %v490
    %v596 = vpop.f32.mrb[0].mxu0
    %v597 = vadd.f32 0.0, %v596
    %v598 = vpop.f32.mrb[0].mxu0
    %v599 = vpop.f32.mrb[0].mxu0
    %v600 = vadd.f32 0.0, %v599
    %v601 = vpop.f32.mrb[0].mxu0
    %602 = vmatprep.mubr.bf16.mxu0 0
    %603 = vmatmul.mubr.bf16.gmra.mrb[0].mxu0 %v491
    %v604 = vpop.f32.mrb[0].mxu0
    %v605 = vadd.f32 0.0, %v604
    %v606 = vpop.f32.mrb[0].mxu0
    %v607 = vpop.f32.mrb[0].mxu0
    %v608 = vadd.f32 0.0, %v607
    %v609 = vpop.f32.mrb[0].mxu0
    %610 = vmatprep.mubr.bf16.mxu0 0
    %611 = vmatmul.mubr.bf16.gmra.mrb[0].mxu0 %v492
    %v612 = vpop.f32.mrb[0].mxu0
    %v613 = vadd.f32 0.0, %v612
    %v614 = vpop.f32.mrb[0].mxu0
    %v615 = vpop.f32.mrb[0].mxu0
    %v616 = vadd.f32 0.0, %v615
    %v617 = vpop.f32.mrb[0].mxu0
    %618 = vmatprep.mubr.bf16.mxu0 0
    %619 = vmatmul.mubr.bf16.gmra.mrb[0].mxu0 %v493
    %v620 = vpop.f32.mrb[0].mxu0
    %v621 = vadd.f32 0.0, %v620
    %v622 = vpop.f32.mrb[0].mxu0
    %v623 = vpop.f32.mrb[0].mxu0
    %v624 = vadd.f32 0.0, %v623
    %v625 = vpop.f32.mrb[0].mxu0
    %626 = vmatprep.mubr.bf16.mxu0 0
    %627 = vmatmul.mubr.bf16.gmra.mrb[0].mxu0 %v494
    %v628 = vpop.f32.mrb[0].mxu0
    %v629 = vadd.f32 0.0, %v628
    %v630 = vpop.f32.mrb[0].mxu0
    %v631 = vpop.f32.mrb[0].mxu0
    %v632 = vadd.f32 0.0, %v631
    %v633 = vpop.f32.mrb[0].mxu0
    %634 = vmatprep.mubr.bf16.mxu0 0
    %635 = vmatmul.mubr.bf16.gmra.mrb[0].mxu0 %v495
    %v636 = vpop.f32.mrb[0].mxu0
    %v637 = vadd.f32 0.0, %v636
    %v638 = vpop.f32.mrb[0].mxu0
    %v639 = vpop.f32.mrb[0].mxu0
    %v640 = vadd.f32 0.0, %v639
    %v641 = vpop.f32.mrb[0].mxu0
    %642 = vmatprep.mubr.bf16.mxu0 0
    %643 = vmatmul.mubr.bf16.gmra.mrb[0].mxu0 %v496
    %v644 = vpop.f32.mrb[0].mxu0
    %v645 = vadd.f32 0.0, %v644
    %v646 = vpop.f32.mrb[0].mxu0
    %v647 = vpop.f32.mrb[0].mxu0
    %v648 = vadd.f32 0.0, %v647
    %v649 = vpop.f32.mrb[0].mxu0
    %650 = vmatprep.mubr.bf16.mxu0 0
    %651 = vmatmul.mubr.bf16.gmra.mrb[0].mxu0 %v497
    %v652 = vpop.f32.mrb[0].mxu0
    %v653 = vadd.f32 0.0, %v652
    %v654 = vpop.f32.mrb[0].mxu0
    %v655 = vpop.f32.mrb[0].mxu0
    %v656 = vadd.f32 0.0, %v655
    %v657 = vpop.f32.mrb[0].mxu0
    %658 = vdwg.mxu0
    %v659 = vpack.c.bf16 %v600, %v597
    %v660 = vpack.c.bf16 %v608, %v605
    %v661 = vpack.c.bf16 %v616, %v613
    %v662 = vpack.c.bf16 %v624, %v621
    %v663 = vpack.c.bf16 %v632, %v629
    %v664 = vpack.c.bf16 %v640, %v637
    %v665 = vpack.c.bf16 %v648, %v645
    %v666 = vpack.c.bf16 %v656, %v653
    %v675 = vunpack.c.l.b16 %v659
    %v676 = vunpack.c.h.b16 %v659
    %v677 = vunpack.c.l.b16 %v660
    %v678 = vunpack.c.h.b16 %v660
    %v679 = vunpack.c.l.b16 %v661
    %v680 = vunpack.c.h.b16 %v661
    %v681 = vunpack.c.l.b16 %v662
    %v682 = vunpack.c.h.b16 %v662
    %v683 = vunpack.c.l.b16 %v663
    %v684 = vunpack.c.h.b16 %v663
    %v685 = vunpack.c.l.b16 %v664
    %v686 = vunpack.c.h.b16 %v664
    %v687 = vunpack.c.l.b16 %v665
    %v688 = vunpack.c.h.b16 %v665
    %v689 = vunpack.c.l.b16 %v666
    %v690 = vunpack.c.h.b16 %v666
    %v691 = vpack.c.b16 %v675, %v675
    %v692 = vpack.c.b16 %v676, %v676
    %v693 = vpack.c.b16 %v677, %v677
    %v694 = vpack.c.b16 %v678, %v678
    %v695 = vpack.c.b16 %v679, %v679
    %v696 = vpack.c.b16 %v680, %v680
    %v697 = vpack.c.b16 %v681, %v681
    %v698 = vpack.c.b16 %v682, %v682
    %v699 = vpack.c.b16 %v683, %v683
    %v700 = vpack.c.b16 %v684, %v684
    %v701 = vpack.c.b16 %v685, %v685
    %v702 = vpack.c.b16 %v686, %v686
    %v703 = vpack.c.b16 %v687, %v687
    %v704 = vpack.c.b16 %v688, %v688
    %v705 = vpack.c.b16 %v689, %v689
    %v706 = vpack.c.b16 %v690, %v690
    %723 = vst [vmem:[%s4] sm:$0xf] %v691
    %724 = vst [vmem:[%s4 + $0x4] sm:$0xf] %v692
    %725 = vst [vmem:[%s4 + $0x8] sm:$0xf] %v693
    %726 = vst [vmem:[%s4 + $0xc] sm:$0xf] %v694
    %727 = vst [vmem:[%s4 + $0x10] sm:$0xf] %v695
    %728 = vst [vmem:[%s4 + $0x14] sm:$0xf] %v696
    %729 = vst [vmem:[%s4 + $0x18] sm:$0xf] %v697
    %730 = vst [vmem:[%s4 + $0x1c] sm:$0xf] %v698
    %731 = vst [vmem:[%s4 + $0x20] sm:$0xf] %v699
    %732 = vst [vmem:[%s4 + $0x24] sm:$0xf] %v700
    %733 = vst [vmem:[%s4 + $0x28] sm:$0xf] %v701
    %734 = vst [vmem:[%s4 + $0x2c] sm:$0xf] %v702
    %735 = vst [vmem:[%s4 + $0x30] sm:$0xf] %v703
    %736 = vst [vmem:[%s4 + $0x34] sm:$0xf] %v704
    %737 = vst [vmem:[%s4 + $0x38] sm:$0xf] %v705
    %738 = vst [vmem:[%s4 + $0x3c] sm:$0xf] %v706
  $region25: #{vgae_encoder.2} parent=0 // pred_fallthru
    _
  // Predicated region
  $region26: #{vgae_encoder.2} parent=0 // pred_check
    _
  $region27: #{vgae_encoder.2} parent=0 // pred_check_branch
    %740 = sbr.rel (0) target = $region29
  $region28: #{vgae_encoder.2} parent=0 // pred_region
    _
  $region29: #{vgae_encoder.2} parent=0 // pred_fallthru
    _
  // Predicated region
  $region30: #{vgae_encoder.2} parent=0 // pred_check
    _
  $region31: #{vgae_encoder.2} parent=0 // pred_check_branch
    %742 = sbr.rel (0) target = $region33
  $region32: #{vgae_encoder.2} parent=0 // pred_region
    _
  $region33: #{vgae_encoder.2} parent=0 // pred_fallthru
    _

</llo_original>
